<compile_context>
chip_gen: v7x
topology: tpu7x:2x2x1
jax: 0.10.0
libtpu: 0.0.40
codegen_flags: <defaults>
</compile_context>

<pallas_src>
import functools

import numpy as np

import jax
import jax.numpy as jnp
from jax.experimental import pallas as pl
from jax.experimental.pallas import tpu as pltpu

_LANE = 1024           # 8 x 128 lanes -> full vreg lane fill, wide DMAs
_SUBLANE = 8
_MAX_TILE_ROWS = 512   # 512 * 1024 * 4 B = 2 MiB input block (4 MiB dbl-buffered)
_NUM_PAR = 2           # leading "parallel" grid axis (v7x: 2 TensorCores/chip)


def _round_up(x, m):
    return (x + m - 1) // m * m


def _fused_sumsq_kernel(tile_idx_ref, seg_ref, first_ref, x_ref, acc_ref):
    """Accumulate per-(slice, embedding) partial sums of x**2.

    x_ref   : (tile_rows, _LANE) current input tile (any float dtype)
    acc_ref : (1, 1, 8, _LANE) resident fp32 output block for (slice, embedding)
    """
    p = pl.program_id(0)
    t = pl.program_id(1)
    j = p * pl.num_programs(1) + t

    # Zero the accumulator block on the first tile of this (slice, embedding) run.
    @pl.when(first_ref[j] == 1)
    def _():
        acc_ref[...] = jnp.zeros_like(acc_ref)

    x = x_ref[...].astype(jnp.float32)                       # (tile_rows, LANE)
    x2 = x * x
    # Fold the tile down to one (8, LANE) vreg-row group: the reshape groups
    # consecutive 8-row sublane tiles (layout preserving), the sum over axis 0
    # is pure VPU vreg adds -- no XLU cross-lane reduce in the hot loop.
    part = jnp.sum(x2.reshape(-1, _SUBLANE, _LANE), axis=0)  # (8, LANE)
    acc_ref[...] += part[None, None, :, :]


def _fused_sum_squares(embeddings, *, max_tile_rows=_MAX_TILE_ROWS,
                       num_par=_NUM_PAR):
    """Returns fp32 vector of shape (E,): sum(e**2) for each embedding."""
    num_emb = len(embeddings)
    dtype = jnp.result_type(*[e.dtype for e in embeddings])
    itemsize = np.dtype(dtype).itemsize
    flat_sizes = [int(np.prod(e.shape)) for e in embeddings]

    # Rows of width _LANE needed per embedding.
    rows = [max(1, -(-s // _LANE)) for s in flat_sizes]

    # Row tile: as large as allowed, but don't over-pad tiny tables.
    # Multiple of 16 so bf16 inputs stay sublane-pack aligned.
    tile_rows = min(max_tile_rows, _round_up(max(rows), 2 * _SUBLANE))
    tile_rows = max(tile_rows, 2 * _SUBLANE)

    # Per-embedding tile counts, rounded so every parallel slice owns >= 1 tile
    # of every embedding (guarantees every output block gets initialized).
    tiles = [_round_up(-(-r // tile_rows), num_par) for r in rows]
    total_tiles = sum(tiles)
    tiles_per_slice = total_tiles // num_par
    total_rows = total_tiles * tile_rows

    # Flatten + zero-pad each table to a whole number of tiles, then concat.
    pieces = []
    for e, n_tiles, size in zip(embeddings, tiles, flat_sizes):
        flat = jnp.reshape(e, (-1,)).astype(dtype)
        padded = n_tiles * tile_rows * _LANE
        flat = jnp.pad(flat, (0, padded - size))
        pieces.append(jnp.reshape(flat, (n_tiles * tile_rows, _LANE)))
    x = jnp.concatenate(pieces, axis=0)                       # (total_rows, LANE)

    # Static schedule (plain numpy at trace time): for each grid step, which
    # global tile it reads, which embedding it belongs to, and whether it is
    # the first tile of that (slice, embedding) run.
    tile_idx = np.zeros((num_par, tiles_per_slice), np.int32)
    seg = np.zeros((num_par, tiles_per_slice), np.int32)
    first = np.zeros((num_par, tiles_per_slice), np.int32)
    emb_start = np.concatenate([[0], np.cumsum(tiles)])
    for p in range(num_par):
        pos = 0
        for e in range(num_emb):
            per = tiles[e] // num_par
            g0 = int(emb_start[e]) + p * per
            tile_idx[p, pos:pos + per] = np.arange(g0, g0 + per, dtype=np.int32)
            seg[p, pos:pos + per] = e
            first[p, pos] = 1
            pos += per
    tile_idx = jnp.asarray(tile_idx.reshape(-1))
    seg = jnp.asarray(seg.reshape(-1))
    first = jnp.asarray(first.reshape(-1))

    tps = tiles_per_slice  # closed over by the index maps

    in_spec = pl.BlockSpec(
        (tile_rows, _LANE),
        lambda p, t, ti, sg, fr: (ti[p * tps + t], 0))
    out_spec = pl.BlockSpec(
        (1, 1, _SUBLANE, _LANE),
        lambda p, t, ti, sg, fr: (p, sg[p * tps + t], 0, 0))

    cost = pl.CostEstimate(
        flops=2 * total_rows * _LANE,
        transcendentals=0,
        bytes_accessed=total_rows * _LANE * itemsize
        + num_par * num_emb * _SUBLANE * _LANE * 4)

    partials = pl.pallas_call(
        _fused_sumsq_kernel,
        out_shape=jax.ShapeDtypeStruct(
            (num_par, num_emb, _SUBLANE, _LANE), jnp.float32),
        grid_spec=pltpu.PrefetchScalarGridSpec(
            num_scalar_prefetch=3,
            grid=(num_par, tiles_per_slice),
            in_specs=[in_spec],
            out_specs=out_spec),
        compiler_params=pltpu.CompilerParams(
            dimension_semantics=("parallel", "arbitrary")),
        cost_estimate=cost,
    )(tile_idx, seg, first, x)

    # Tiny final reduce (num_par * E * 8 * 1024 floats), done once in JAX.
    return jnp.sum(partials, axis=(0, 2, 3))                  # (E,) float32


@functools.partial(jax.jit, static_argnames=("norm", "require_pow"))
def emb_loss(*embeddings, norm=2, require_pow=False):
    """JAX/Pallas equivalent of EmbLoss.forward (norm=2, the module default)."""
    # TODO(synk): general p-norm (norm != 2) not implemented; module default is 2.
    assert norm == 2
    sumsq = _fused_sum_squares(embeddings)     # (E,) = ||e_i||_2 ** 2 each
    batch = embeddings[-1].shape[0]
    if require_pow:
        total = jnp.sum(sumsq) / batch / norm
    else:
        total = jnp.sum(jnp.sqrt(sumsq)) / batch
    # torch.zeros(1) accumulator -> result has shape (1,)
    return jnp.reshape(total.astype(jnp.float32), (1,))


if __name__ == "__main__":
    key = jax.random.PRNGKey(0)
    k1, k2, k3 = jax.random.split(key, 3)

    # Small shapes consistent with LightGCN usage: user/item embedding tables.
    user_emb = jax.random.normal(k1, (16, 32), dtype=jnp.float32)
    item_emb = jax.random.normal(k2, (24, 32), dtype=jnp.float32)
    # Odd-sized table to exercise the padding / ragged-size path.
    extra_emb = jax.random.normal(k3, (5, 48), dtype=jnp.float32)

    out = emb_loss(user_emb, item_emb, require_pow=False)
    out_pow = emb_loss(user_emb, item_emb, require_pow=True)
    out3 = emb_loss(user_emb, item_emb, extra_emb, require_pow=False)
    jax.block_until_ready((out, out_pow, out3))

    # Pure-JAX references (mirror the PyTorch semantics).
    ref = (jnp.linalg.norm(user_emb) + jnp.linalg.norm(item_emb)) / item_emb.shape[0]
    ref_pow = (jnp.sum(user_emb ** 2) + jnp.sum(item_emb ** 2)) / item_emb.shape[0] / 2.0
    ref3 = (jnp.linalg.norm(user_emb) + jnp.linalg.norm(item_emb)
            + jnp.linalg.norm(extra_emb)) / extra_emb.shape[0]

    assert out.shape == (1,) and out_pow.shape == (1,) and out3.shape == (1,)
    assert jnp.allclose(out[0], ref, rtol=1e-5, atol=1e-5)
    assert jnp.allclose(out_pow[0], ref_pow, rtol=1e-5, atol=1e-5)
    assert jnp.allclose(out3[0], ref3, rtol=1e-5, atol=1e-5)

    print("KERNEL_OK")
</pallas_src>

<mosaic_0001>
module attributes {stable_mosaic.version = 11 : i64} {
  func.func @_fused_sumsq_kernel(%arg0: i32, %arg1: i32, %arg2: memref<4xi32, #tpu.memory_space<smem>>, %arg3: memref<4xi32, #tpu.memory_space<smem>>, %arg4: memref<4xi32, #tpu.memory_space<smem>>, %arg5: memref<16x1024xf32, #tpu.memory_space<vmem>>, %arg6: memref<1x1x8x1024xf32, #tpu.memory_space<vmem>>) attributes {dimension_semantics = [#tpu.dimension_semantics<parallel>, #tpu.dimension_semantics<arbitrary>], iteration_bounds = array<i64: 2, 2>, scalar_prefetch = 3 : i64, scratch_operands = 0 : i64, tpu.core_type = #tpu.core_type<tc>, window_params = [{transform_indices = @transform_0, window_bounds = array<i64: 16, 1024>}, {transform_indices = @transform_1, window_bounds = array<i64: 1, 1, 8, 1024>}]} {
    %c2_i32 = arith.constant 2 : i32
    %0 = arith.muli %arg0, %c2_i32 : i32
    %1 = arith.addi %0, %arg1 : i32
    %2 = arith.index_cast %1 : i32 to index
    %3 = memref.load %arg4[%2] : memref<4xi32, #tpu.memory_space<smem>>
    %c1_i32 = arith.constant 1 : i32
    %4 = arith.cmpi eq, %3, %c1_i32 : i32
    %5 = arith.extui %4 : i1 to i32
    %c0_i32 = arith.constant 0 : i32
    %6 = arith.cmpi ne, %5, %c0_i32 : i32
    scf.if %6 {
      %cst_9 = arith.constant 0.000000e+00 : f32
      %15 = vector.broadcast %cst_9 : f32 to vector<1x1x8x1024xf32>
      %c0_10 = arith.constant 0 : index
      %c0_11 = arith.constant 0 : index
      %c0_12 = arith.constant 0 : index
      %c0_13 = arith.constant 0 : index
      %16 = vector.load %arg6[%c0_10, %c0_11, %c0_12, %c0_13] : memref<1x1x8x1024xf32, #tpu.memory_space<vmem>>, vector<1x1x8x1024xf32>
      tpu.vector_store %arg6[%c0_10, %c0_11, %c0_12, %c0_13], %15 {strides = array<i32>} : memref<1x1x8x1024xf32, #tpu.memory_space<vmem>>, vector<1x1x8x1024xf32>,
    } else {
    }
    %c0 = arith.constant 0 : index
    %c0_0 = arith.constant 0 : index
    %7 = vector.load %arg5[%c0, %c0_0] : memref<16x1024xf32, #tpu.memory_space<vmem>>, vector<16x1024xf32>
    %8 = arith.mulf %7, %7 : vector<16x1024xf32>
    %9 = vector.shape_cast %8 : vector<16x1024xf32> to vector<2x8x1024xf32>
    %cst = arith.constant dense<0.000000e+00> : vector<8x1024xf32>
    %10 = vector.multi_reduction <add>, %9, %cst [0] : vector<2x8x1024xf32> to vector<8x1024xf32>
    %c0_1 = arith.constant 0 : index
    %c0_2 = arith.constant 0 : index
    %c0_3 = arith.constant 0 : index
    %c0_4 = arith.constant 0 : index
    %11 = vector.load %arg6[%c0_1, %c0_2, %c0_3, %c0_4] : memref<1x1x8x1024xf32, #tpu.memory_space<vmem>>, vector<1x1x8x1024xf32>
    %12 = vector.shape_cast %10 : vector<8x1024xf32> to vector<1x1x8x1024xf32>
    %13 = arith.addf %11, %12 : vector<1x1x8x1024xf32>
    %c0_5 = arith.constant 0 : index
    %c0_6 = arith.constant 0 : index
    %c0_7 = arith.constant 0 : index
    %c0_8 = arith.constant 0 : index
    %14 = vector.load %arg6[%c0_5, %c0_6, %c0_7, %c0_8] : memref<1x1x8x1024xf32, #tpu.memory_space<vmem>>, vector<1x1x8x1024xf32>
    tpu.vector_store %arg6[%c0_5, %c0_6, %c0_7, %c0_8], %13 {strides = array<i32>} : memref<1x1x8x1024xf32, #tpu.memory_space<vmem>>, vector<1x1x8x1024xf32>,
    return
  }
  func.func @transform_0(%arg0: i32, %arg1: i32, %arg2: memref<4xi32, #tpu.memory_space<smem>>, %arg3: memref<4xi32, #tpu.memory_space<smem>>, %arg4: memref<4xi32, #tpu.memory_space<smem>>) -> (i32, i32) {
    %c2_i32 = arith.constant 2 : i32
    %0 = arith.muli %arg0, %c2_i32 : i32
    %1 = arith.addi %0, %arg1 : i32
    %2 = arith.index_cast %1 : i32 to index
    %3 = memref.load %arg2[%2] : memref<4xi32, #tpu.memory_space<smem>>
    %c0_i32 = arith.constant 0 : i32
    %c0_i32_0 = arith.constant 0 : i32
    return %3, %c0_i32 : i32, i32
  }
  func.func @transform_1(%arg0: i32, %arg1: i32, %arg2: memref<4xi32, #tpu.memory_space<smem>>, %arg3: memref<4xi32, #tpu.memory_space<smem>>, %arg4: memref<4xi32, #tpu.memory_space<smem>>) -> (i32, i32, i32, i32) {
    %c2_i32 = arith.constant 2 : i32
    %0 = arith.muli %arg0, %c2_i32 : i32
    %1 = arith.addi %0, %arg1 : i32
    %2 = arith.index_cast %1 : i32 to index
    %3 = memref.load %arg3[%2] : memref<4xi32, #tpu.memory_space<smem>>
    %c0_i32 = arith.constant 0 : i32
    %c0_i32_0 = arith.constant 0 : i32
    %c0_i32_1 = arith.constant 0 : i32
    return %arg0, %3, %c0_i32, %c0_i32_0 : i32, i32, i32, i32
  }
}

</mosaic_0001>

<llo_original>
// kernel: emb_loss.1
$region0: #{emb_loss.1}
  #allocation0 [shape = 'u32[]', space=smem, size = 0x4, offset = 0x4, fixed_abs, tag = 'smem constant byte address 0x4 - core index']
  #allocation1 [shape = 'u32[144,128]{1,0:T(1,128)}', space=vmem, size = 0x12000, scoped, tag = 'internal scratch']
  #allocation2 [shape = 's32[1]{0}', space=sflag, size = 0x4, scoped, tag = 'scoped memory for emb_loss.1']
  #allocation3 [shape = 'u8[512]{0}', space=smem, size = 0x200, scoped, tag = 'prefetched SMEM operand 0']
  #allocation4 [shape = 'u8[512]{0}', space=smem, size = 0x200, scoped, tag = 'prefetched SMEM operand 1']
  #allocation5 [shape = 'u8[512]{0}', space=smem, size = 0x200, scoped, tag = 'prefetched SMEM operand 2']
  %s0 = inlined_call_operand.vmem [shape: s32[4], index: 0, kind: input, shape index: {}]
  %s1 = inlined_call_operand.vmem [shape: s32[4], index: 1, kind: input, shape index: {}]
  %s2 = inlined_call_operand.vmem [shape: s32[4], index: 2, kind: input, shape index: {}]
  %s3 = inlined_call_operand.vmem [shape: f32[64,1024], index: 3, kind: input, shape index: {}]
  %s4 = inlined_call_operand.vmem [shape: f32[2,2,8,1024], index: 4, kind: output, shape index: {}]
  %s5 = sld [smem:[#allocation0]]
  $region41: #{emb_loss.1} parent=0
    _
  %s7 = ssub.s32 1, %s5
  %s8 = scalar_select 0, %s7, %s5
  %s9 = sshll.u32 %s0, 4
  %s10 = int_to_ptr.vmem [resolvable:$true] %s9
  %12 = dma.vmem_to_smem %s10, 16, [#allocation3], [#allocation2]
  %s13 = sshll.u32 %s1, 4
  %s14 = int_to_ptr.vmem [resolvable:$true] %s13
  %16 = dma.vmem_to_smem %s14, 16, [#allocation4], [#allocation2]
  %s17 = sshll.u32 %s2, 4
  %s18 = int_to_ptr.vmem [resolvable:$true] %s17
  %20 = dma.vmem_to_smem %s18, 16, [#allocation5], [#allocation2]
  %21 = dma.done [#allocation2], 48
  %22 = sfence
  loop: start=0, step=1, limit=6
  $region2: #{emb_loss.1} parent=0 // loop_pre_header
    _
  $region3: #{emb_loss.1} parent=0 // loop_header
    %s24 = sphi 0, %s28
    %p25 = scmp.ge.s32.totalorder %s24, 6
    %s31 = sphi 0, %s43
    %s32 = sphi 0, %s39
    %s33 = sphi 0, %s31
    %s34 = sphi 0, %s32
    %s35 = sphi 0, %s33
    %s36 = sphi 0, %s34
    %s52 = sphi 0, %s54
    %s55 = sphi 0, %s52
    %s56 = sphi 0, %s55
    %s72 = sphi 0, %s56
    %s86 = sphi 0, %s88
    %s89 = sphi 0, %s86
    %s90 = sphi 0, %s89
    %s106 = sphi 0, %s90
  $region4: #{emb_loss.1} parent=0 // loop_header_branch
    %27 = sbr.rel (%p25) target = $region8
  $region5: #{emb_loss.1} parent=0 // loop_body
    %s29 = ssub.s32 %s24, 1
    %s30 = ssub.s32 %s24, 2
    %s37 = sadd.s32 1, %s32
    %p38 = scmp.ge.s32.totalorder %s37, 2
    %s39 = scalar_select %p38, 0, %s37
    %s40 = sadd.s32 1, %s31
    %s41 = scalar_select %p38, %s40, %s31
    %p42 = scmp.ge.s32.totalorder %s41, 2
    %s43 = scalar_select %p42, 0, %s41
    %s44 = smul.u32 %s31, 2
    %s45 = sadd.s32 %s44, %s32
    %s46 = sld [smem:[#allocation3 + %s45]]
    %s47 = smul.u32 %s43, 2
    %s48 = sadd.s32 %s47, %s39
    %s49 = sld [smem:[#allocation3 + %s48]]
    %s50 = ssub.s32 %s46, %s49
    %p51 = scmp.eq.s32.totalorder %s50, 0
    %s53 = sadd.s32 %s52, 1
    %s54 = scalar_select %p51, %s52, %s53
    %p57 = pneg %p51
    %p58 = scmp.eq.s32.totalorder %s24, 3
    %p59 = por %p57, %p58
    %p60 = scmp.ne.s32.totalorder %s52, %s55
    %p61 = scmp.eq.s32.totalorder %s24, 0
    %p62 = por %p60, %p61
    %p63 = scmp.ne.s32.totalorder %s52, %s55
    %p64 = scmp.eq.s32.totalorder %s29, 3
    %p65 = por %p63, %p64
    %p66 = scmp.ne.s32.totalorder %s55, %s56
    %p67 = scmp.eq.s32.totalorder %s29, 0
    %p68 = por %p66, %p67
    %p69 = scmp.ne.s32.totalorder %s55, %s56
    %p70 = scmp.eq.s32.totalorder %s30, 3
    %p71 = por %p69, %p70
    %p73 = scmp.ne.s32.totalorder %s56, %s72
    %p74 = scmp.eq.s32.totalorder %s30, 0
    %p75 = por %p73, %p74
    %s76 = smul.u32 %s31, 2
    %s77 = sadd.s32 %s76, %s32
    %s78 = sld [smem:[#allocation4 + %s77]]
    %s79 = smul.u32 %s43, 2
    %s80 = sadd.s32 %s79, %s39
    %s81 = sld [smem:[#allocation4 + %s80]]
    %s82 = ssub.s32 %s31, %s43
    %s83 = ssub.s32 %s78, %s81
    %s84 = sor.u32 %s82, %s83
    %p85 = scmp.eq.s32.totalorder %s84, 0
    %s87 = sadd.s32 %s86, 1
    %s88 = scalar_select %p85, %s86, %s87
    %p91 = pneg %p85
    %p92 = scmp.eq.s32.totalorder %s24, 3
    %p93 = por %p91, %p92
    %p94 = scmp.ne.s32.totalorder %s86, %s89
    %p95 = scmp.eq.s32.totalorder %s24, 0
    %p96 = por %p94, %p95
    %p97 = scmp.ne.s32.totalorder %s86, %s89
    %p98 = scmp.eq.s32.totalorder %s29, 3
    %p99 = por %p97, %p98
    %p100 = scmp.ne.s32.totalorder %s89, %s90
    %p101 = scmp.eq.s32.totalorder %s29, 0
    %p102 = por %p100, %p101
    %p103 = scmp.ne.s32.totalorder %s89, %s90
    %p104 = scmp.eq.s32.totalorder %s30, 3
    %p105 = por %p103, %p104
    %p107 = scmp.ne.s32.totalorder %s90, %s106
    %p108 = scmp.eq.s32.totalorder %s30, 0
    %p109 = por %p107, %p108
    %p110 = scmp.le.s32.totalorder 1, %s24
    %p111 = scmp.lt.s32.totalorder %s24, 5
    %p112 = pnand %p110, %p111
    %p113 = pneg %p112
    // Predicated region
    $region9: #{emb_loss.1} parent=5 // pred_check
      _
    $region10: #{emb_loss.1} parent=5 // pred_check_branch
      %115 = sbr.rel (%p112) target = $region12
    $region11: #{emb_loss.1} parent=5 // pred_region
      %s116 = ssub.s32 %s24, 1
    $region12: #{emb_loss.1} parent=5 // pred_fallthru
      _
    %p117 = scmp.lt.s32.totalorder %s24, 4
    // Predicated region
    $region13: #{emb_loss.1} parent=5 // pred_check
      %p118 = pneg %p117
    $region14: #{emb_loss.1} parent=5 // pred_check_branch
      %120 = sbr.rel (%p118) target = $region16
    $region15: #{emb_loss.1} parent=5 // pred_region
      // Predicated region
      $region17: #{emb_loss.1} parent=15 // pred_check
        %p121 = pneg %p62
      $region18: #{emb_loss.1} parent=15 // pred_check_branch
        %123 = sbr.rel (%p121) target = $region20
      $region19: #{emb_loss.1} parent=15 // pred_region
        %s124 = smul.u32 %s31, 2
        %s125 = sadd.s32 %s124, %s32
        %s126 = sld [smem:[#allocation3 + %s125]]
        %s127 = smul.u32 2, %s126
        %p128 = scmp.lt.s32.totalorder %s127, 7
        %s129 = scalar_select %p128, %s127, 7
        %s130 = smul.addr %s129, 8
        %s131 = smul.addr %s130, 8
        %s132 = scalar_lea.vmem %s3, %s131
        %s133 = smul.u32 %s31, 2
        %s134 = sadd.s32 %s133, %s32
        %s135 = sld [smem:[#allocation3 + %s134]]
        %s136 = smul.u32 2, %s135
      $region20: #{emb_loss.1} parent=15 // pred_fallthru
        _
    $region16: #{emb_loss.1} parent=5 // pred_fallthru
      _
    %p137 = scmp.le.s32.totalorder 1, %s24
    %p138 = scmp.lt.s32.totalorder %s24, 5
    %p139 = pnand %p137, %p138
    %p140 = pneg %p139
    // Predicated region
    $region21: #{emb_loss.1} parent=5 // pred_check
      _
    $region22: #{emb_loss.1} parent=5 // pred_check_branch
      %142 = sbr.rel (%p139) target = $region24
    $region23: #{emb_loss.1} parent=5 // pred_region
      %s143 = ssub.s32 %s24, 1
      %s144 = smul.u32 %s33, 2
      %s145 = sadd.s32 %s144, %s34
      %s146 = sld [smem:[#allocation3 + %s145]]
      %s147 = smul.u32 2, %s146
      %p148 = scmp.lt.s32.totalorder %s147, 7
      %s149 = scalar_select %p148, %s147, 7
      %s150 = smul.addr %s149, 8
      %s151 = smul.addr %s150, 8
      %s152 = scalar_lea.vmem %s3, %s151
      %p153 = pneg %p68
      %p154 = pneg %p65
      %p155 = pneg %p102
      %p156 = pneg %p99
      %s157 = smul.u32 %s33, 2
      %s158 = sadd.s32 %s157, %s34
      %s159 = sld [smem:[#allocation4 + %s158]]
      %p160 = scmp.lt.s32.totalorder %s33, 1
      %s161 = scalar_select %p160, %s33, 1
      %p162 = scmp.lt.s32.totalorder %s159, 1
      %s163 = scalar_select %p162, %s159, 1
      %s164 = smul.addr %s163, 8
      %s165 = smul.addr %s161, 16
      %s166 = sadd.s32 %s164, %s165
      %s167 = smul.addr %s166, 8
      %s168 = scalar_lea.vmem %s4, %s167
      %s169 = smul.u32 %s33, 2
      %s170 = sadd.s32 %s169, %s34
      %s171 = sld [smem:[#allocation3 + %s170]]
      %s172 = smul.u32 2, %s171
      %p173 = scmp.lt.s32.totalorder %s172, 7
      %s174 = scalar_select %p173, %s172, 7
      %s175 = smul.addr %s174, 8
      %s176 = smul.addr %s175, 8
      %s177 = scalar_lea.vmem %s3, %s176
      %s178 = smul.u32 %s33, 2
      %s179 = sadd.s32 %s178, %s34
      %s180 = sld [smem:[#allocation3 + %s179]]
      %s181 = smul.u32 2, %s180
      %s182 = smul.u32 %s33, 2
      %s183 = sadd.s32 %s182, %s34
      %s184 = sld [smem:[#allocation4 + %s183]]
      %p185 = scmp.lt.s32.totalorder %s33, 1
      %s186 = scalar_select %p185, %s33, 1
      %p187 = scmp.lt.s32.totalorder %s184, 1
      %s188 = scalar_select %p187, %s184, 1
      %s189 = smul.addr %s188, 8
      %s190 = smul.addr %s186, 16
      %s191 = sadd.s32 %s189, %s190
      %s192 = smul.addr %s191, 8
      %s193 = scalar_lea.vmem %s4, %s192
      %s194 = smul.u32 %s33, 2
      %s195 = sadd.s32 %s194, %s34
      %s196 = sld [smem:[#allocation4 + %s195]]
      %s197 = smul.u32 %s33, 2
      %s198 = sadd.s32 %s197, %s34
      %s199 = sld [smem:[#allocation5 + %s198]]
      %p200 = scmp.eq.s32.totalorder %s199, 1
      // Predicated region
      $region25: #{emb_loss.1} parent=23 // pred_check
        %p201 = pneg %p200
      $region26: #{emb_loss.1} parent=23 // pred_check_branch
        %203 = sbr.rel (%p201) target = $region28
      $region27: #{emb_loss.1} parent=23 // pred_region
        %204 = vst [vmem:[%s193] sm:$0xff] 0.0
        %205 = vst [vmem:[%s193 + $0x8] sm:$0xff] 0.0
        %206 = vst [vmem:[%s193 + $0x10] sm:$0xff] 0.0
        %207 = vst [vmem:[%s193 + $0x18] sm:$0xff] 0.0
        %208 = vst [vmem:[%s193 + $0x20] sm:$0xff] 0.0
        %209 = vst [vmem:[%s193 + $0x28] sm:$0xff] 0.0
        %210 = vst [vmem:[%s193 + $0x30] sm:$0xff] 0.0
        %211 = vst [vmem:[%s193 + $0x38] sm:$0xff] 0.0
      $region28: #{emb_loss.1} parent=23 // pred_fallthru
        _
      %v212 = vld [vmem:[%s177] sm:$0xff]
      %v213 = vld [vmem:[%s177 + $0x8] sm:$0xff]
      %v214 = vld [vmem:[%s177 + $0x10] sm:$0xff]
      %v215 = vld [vmem:[%s177 + $0x18] sm:$0xff]
      %v216 = vld [vmem:[%s177 + $0x20] sm:$0xff]
      %v217 = vld [vmem:[%s177 + $0x28] sm:$0xff]
      %v218 = vld [vmem:[%s177 + $0x30] sm:$0xff]
      %v219 = vld [vmem:[%s177 + $0x38] sm:$0xff]
      %v220 = vld [vmem:[%s177 + $0x40] sm:$0xff]
      %v221 = vld [vmem:[%s177 + $0x48] sm:$0xff]
      %v222 = vld [vmem:[%s177 + $0x50] sm:$0xff]
      %v223 = vld [vmem:[%s177 + $0x58] sm:$0xff]
      %v224 = vld [vmem:[%s177 + $0x60] sm:$0xff]
      %v225 = vld [vmem:[%s177 + $0x68] sm:$0xff]
      %v226 = vld [vmem:[%s177 + $0x70] sm:$0xff]
      %v227 = vld [vmem:[%s177 + $0x78] sm:$0xff]
      %v228 = vmul.f32 %v212, %v212
      %v229 = vmul.f32 %v213, %v213
      %v230 = vmul.f32 %v214, %v214
      %v231 = vmul.f32 %v215, %v215
      %v232 = vmul.f32 %v216, %v216
      %v233 = vmul.f32 %v217, %v217
      %v234 = vmul.f32 %v218, %v218
      %v235 = vmul.f32 %v219, %v219
      %v236 = vmul.f32 %v220, %v220
      %v237 = vmul.f32 %v221, %v221
      %v238 = vmul.f32 %v222, %v222
      %v239 = vmul.f32 %v223, %v223
      %v240 = vmul.f32 %v224, %v224
      %v241 = vmul.f32 %v225, %v225
      %v242 = vmul.f32 %v226, %v226
      %v243 = vmul.f32 %v227, %v227
      %v244 = vadd.f32 %v228, %v236
      %v245 = vadd.f32 %v229, %v237
      %v246 = vadd.f32 %v230, %v238
      %v247 = vadd.f32 %v231, %v239
      %v248 = vadd.f32 %v232, %v240
      %v249 = vadd.f32 %v233, %v241
      %v250 = vadd.f32 %v234, %v242
      %v251 = vadd.f32 %v235, %v243
      %v252 = vld [vmem:[%s193] sm:$0xff]
      %v253 = vld [vmem:[%s193 + $0x8] sm:$0xff]
      %v254 = vld [vmem:[%s193 + $0x10] sm:$0xff]
      %v255 = vld [vmem:[%s193 + $0x18] sm:$0xff]
      %v256 = vld [vmem:[%s193 + $0x20] sm:$0xff]
      %v257 = vld [vmem:[%s193 + $0x28] sm:$0xff]
      %v258 = vld [vmem:[%s193 + $0x30] sm:$0xff]
      %v259 = vld [vmem:[%s193 + $0x38] sm:$0xff]
      %v260 = vadd.f32 %v252, %v244
      %v261 = vadd.f32 %v253, %v245
      %v262 = vadd.f32 %v254, %v246
      %v263 = vadd.f32 %v255, %v247
      %v264 = vadd.f32 %v256, %v248
      %v265 = vadd.f32 %v257, %v249
      %v266 = vadd.f32 %v258, %v250
      %v267 = vadd.f32 %v259, %v251
      %268 = vst [vmem:[%s193] sm:$0xff] %v260
      %269 = vst [vmem:[%s193 + $0x8] sm:$0xff] %v261
      %270 = vst [vmem:[%s193 + $0x10] sm:$0xff] %v262
      %271 = vst [vmem:[%s193 + $0x18] sm:$0xff] %v263
      %272 = vst [vmem:[%s193 + $0x20] sm:$0xff] %v264
      %273 = vst [vmem:[%s193 + $0x28] sm:$0xff] %v265
      %274 = vst [vmem:[%s193 + $0x30] sm:$0xff] %v266
      %275 = vst [vmem:[%s193 + $0x38] sm:$0xff] %v267
      %s276 = smul.u32 %s33, 2
      %s277 = sadd.s32 %s276, %s34
      %s278 = sld [smem:[#allocation4 + %s277]]
      %p279 = scmp.lt.s32.totalorder %s33, 1
      %s280 = scalar_select %p279, %s33, 1
      %p281 = scmp.lt.s32.totalorder %s278, 1
      %s282 = scalar_select %p281, %s278, 1
      %s283 = smul.addr %s282, 8
      %s284 = smul.addr %s280, 16
      %s285 = sadd.s32 %s283, %s284
      %s286 = smul.addr %s285, 8
      %s287 = scalar_lea.vmem %s4, %s286
      // Predicated region
      $region29: #{emb_loss.1} parent=23 // pred_check
        %p288 = pneg %p99
      $region30: #{emb_loss.1} parent=23 // pred_check_branch
        %290 = sbr.rel (%p288) target = $region32
      $region31: #{emb_loss.1} parent=23 // pred_region
        %s291 = smul.u32 %s33, 2
        %s292 = sadd.s32 %s291, %s34
        %s293 = sld [smem:[#allocation4 + %s292]]
      $region32: #{emb_loss.1} parent=23 // pred_fallthru
        _
    $region24: #{emb_loss.1} parent=5 // pred_fallthru
      _
    %p294 = scmp.le.s32.totalorder 2, %s24
    // Predicated region
    $region33: #{emb_loss.1} parent=5 // pred_check
      %p295 = pneg %p294
    $region34: #{emb_loss.1} parent=5 // pred_check_branch
      %297 = sbr.rel (%p295) target = $region36
    $region35: #{emb_loss.1} parent=5 // pred_region
      %s298 = ssub.s32 %s24, 2
      // Predicated region
      $region37: #{emb_loss.1} parent=35 // pred_check
        %p299 = pneg %p105
      $region38: #{emb_loss.1} parent=35 // pred_check_branch
        %301 = sbr.rel (%p299) target = $region40
      $region39: #{emb_loss.1} parent=35 // pred_region
        %s302 = smul.u32 %s35, 2
        %s303 = sadd.s32 %s302, %s36
        %s304 = sld [smem:[#allocation4 + %s303]]
        %p305 = scmp.lt.s32.totalorder %s35, 1
        %s306 = scalar_select %p305, %s35, 1
        %p307 = scmp.lt.s32.totalorder %s304, 1
        %s308 = scalar_select %p307, %s304, 1
        %s309 = smul.addr %s308, 8
        %s310 = smul.addr %s306, 16
        %s311 = sadd.s32 %s309, %s310
        %s312 = smul.addr %s311, 8
        %s313 = scalar_lea.vmem %s4, %s312
      $region40: #{emb_loss.1} parent=35 // pred_fallthru
        _
    $region36: #{emb_loss.1} parent=5 // pred_fallthru
      _
  $region6: #{emb_loss.1} parent=0 // loop_footer
    %s28 = sadd.s32 1, %s24
  $region7: #{emb_loss.1} parent=0 // loop_footer_branch
    %23 = sbr.rel target = $region3
  $region8: #{emb_loss.1} parent=0 // loop_exit
    _

</llo_original>
